<compile_context>
chip_gen: v5e
topology: v5e:2x2
jax: 0.10.0
libtpu: 0.0.40
codegen_flags: <defaults>
</compile_context>

<pallas_src>
import functools

import jax
import jax.numpy as jnp
import numpy as np
from jax import lax
from jax.experimental import pallas as pl
from jax.experimental.pallas import tpu as pltpu


def _distributionlize_kernel(n_real_cols, x_ref, w_ref, raw_ref, like_ref):
    """x_ref   : (TB, K)  seeds, seed-major along K = N*D          (VMEM in)
       w_ref   : (K, C)   block-diagonal action weights, C >= N*A   (VMEM in)
       raw_ref : (TB, C)  rawness, padded to C lanes                (VMEM out)
       like_ref: (TB, C)  softmax(rawness) over the real columns    (VMEM out)
    """
    # Single fused MXU matmul (replaces N tiny dots + transpose + concat).
    raw = jnp.dot(x_ref[...], w_ref[...], preferred_element_type=jnp.float32)

    tb, c = raw.shape
    col = lax.broadcasted_iota(jnp.int32, (tb, c), 1)
    valid = col < n_real_cols

    # Mask once: padded lanes become -inf so exp() on them is exactly 0.
    raw_m = jnp.where(valid, raw, jnp.float32(-jnp.inf))

    # Numerically-stable row softmax over the real (unpadded) columns.
    row_max = jnp.max(raw_m, axis=1, keepdims=True)
    e = jnp.exp(raw_m - row_max)
    denom = jnp.sum(e, axis=1, keepdims=True)
    like = e / denom  # exact division (full precision)

    # Lane-dense (C is a multiple of 128) full-width stores.
    raw_ref[...] = raw.astype(raw_ref.dtype)
    like_ref[...] = like.astype(like_ref.dtype)


def _round_up(x, m):
    return ((x + m - 1) // m) * m


def _vmem_capacity_bytes():
    try:
        return int(pltpu.get_tpu_info().vmem_capacity_bytes)
    except Exception:
        return 64 * 1024 * 1024  # conservative (v7x per-TC VMEM)


def _pick_row_tile(b, k, c, in_itemsize, w_resident_bytes, budget):
    """VMEM-aware row tile: multiple of 8, <=1024, >=4 grid steps when b allows."""
    if b <= 8:
        return b  # single full-extent block satisfies the (8,128) rule

    def working_set(tb):
        # double-buffered x tile + two double-buffered f32 output tiles + W
        return (2 * tb * k * in_itemsize) + (2 * 2 * tb * c * 4) + w_resident_bytes

    tb = min(1024, max(8, _round_up(pl.cdiv(b, 4), 8)))
    tb = min(tb, _round_up(b, 8))
    while tb > 8 and working_set(tb) > budget:
        tb -= 8
    return tb


def distributionlize(action_vector, seeds_vec):
    """action_vector: (A, D).
       seeds_vec    : list of N arrays of shape (B, D), or a stacked (N, B, D).
       Returns (likenesses, rawness), each (B, N*A), f32 — same order as torch."""
    if isinstance(seeds_vec, (list, tuple)):
        # Stack seed-major directly: (B, N, D).  The follow-up reshape to
        # (B, N*D) is contiguous -> no extra transpose copy in HBM.
        x3 = jnp.stack(seeds_vec, axis=1)
    else:
        # Pre-stacked (N, B, D): one transpose is unavoidable for this layout.
        x3 = jnp.transpose(seeds_vec, (1, 0, 2))

    b, n, d = x3.shape
    a, d2 = action_vector.shape
    assert d == d2, "feature dims must match"

    na = n * a                                  # real output columns
    k = n * d                                   # fused contraction length
    c = max(128, _round_up(na, 128))            # lane-dense padded output width

    # Keep the source dtype on the MXU (bf16 stays bf16); f32 accumulate in-kernel.
    in_dtype = jnp.promote_types(x3.dtype, action_vector.dtype)
    in_itemsize = jnp.dtype(in_dtype).itemsize

    # --- Cheap XLA-side layout prep (outside the kernel) -------------------
    x = x3.reshape(b, k).astype(in_dtype)       # contiguous reshape, no copy-transpose
    # Block-diagonal weights: W[n*D + d, n*A + a] = action_vector[a, d].
    w = jnp.einsum("mn,da->mdna", jnp.eye(n, dtype=in_dtype),
                   action_vector.T.astype(in_dtype)).reshape(k, na)
    w = jnp.pad(w, ((0, 0), (0, c - na)))
    # ------------------------------------------------------------------------

    w_bytes = k * c * in_itemsize
    # Single-buffer the (constant index_map) weight operand when it is large
    # — matters most on v7x's 64 MiB VMEM.
    if w_bytes > (2 << 20):
        w_spec = pl.BlockSpec((k, c), lambda i: (0, 0), pipeline_mode=pl.Buffered(1))
        w_resident = w_bytes
    else:
        w_spec = pl.BlockSpec((k, c), lambda i: (0, 0))
        w_resident = 2 * w_bytes

    vmem_cap = _vmem_capacity_bytes()
    budget = min(int(vmem_cap * 0.6), 48 * 1024 * 1024)

    tb = _pick_row_tile(b, k, c, in_itemsize, w_resident, budget)
    grid = (pl.cdiv(b, tb),)

    ws_bytes = (2 * tb * k * in_itemsize) + (2 * 2 * tb * c * 4) + w_resident
    vmem_limit = int(min(vmem_cap * 3 // 4,
                         max(32 * 1024 * 1024, 2 * ws_bytes)))

    kernel = functools.partial(_distributionlize_kernel, na)

    cost = pl.CostEstimate(
        flops=2 * b * n * d * a,                # true FLOPs (not the padded zeros)
        transcendentals=b * na,
        bytes_accessed=(b * k + k * c) * in_itemsize + 2 * b * c * 4,
    )

    raw_p, like_p = pl.pallas_call(
        kernel,
        out_shape=(
            jax.ShapeDtypeStruct((b, c), jnp.float32),  # rawness    (padded)
            jax.ShapeDtypeStruct((b, c), jnp.float32),  # likenesses (padded)
        ),
        grid=grid,
        in_specs=[
            pl.BlockSpec((tb, k), lambda i: (i, 0)),
            w_spec,
        ],
        out_specs=(
            pl.BlockSpec((tb, c), lambda i: (i, 0)),
            pl.BlockSpec((tb, c), lambda i: (i, 0)),
        ),
        compiler_params=pltpu.CompilerParams(
            dimension_semantics=("parallel",),
            vmem_limit_bytes=vmem_limit,
        ),
        cost_estimate=cost,
    )(x, w)

    # Slice away the lane-padding; order matches torch: (likenesses, rawness).
    raw = raw_p[:, :na]
    like = like_p[:, :na]
    return like, raw


def _reference(action_vector, seeds_list):
    raws = [x @ action_vector.T for x in seeds_list]
    raw = jnp.concatenate(raws, axis=1)
    like = jax.nn.softmax(raw, axis=1)
    return like, raw


def _check(action_vector, seeds_list):
    like, raw = distributionlize(action_vector, seeds_list)
    jax.block_until_ready((like, raw))
    like_ref, raw_ref = _reference(action_vector, seeds_list)
    np.testing.assert_allclose(np.asarray(raw), np.asarray(raw_ref),
                               rtol=1e-5, atol=1e-5)
    # likenesses: f32 softmax with a different MXU accumulation order than the
    # per-seed reference matmuls -> allow ~1e-4 relative slack on probabilities.
    np.testing.assert_allclose(np.asarray(like), np.asarray(like_ref),
                               rtol=1e-4, atol=1e-5)


if __name__ == "__main__":
    key = jax.random.PRNGKey(0)
    k_act, k_seed = jax.random.split(key)

    # Small shapes consistent with the forward pass:
    #   N=3 seed matrices, each (B, D=32); action_vector (A=16, D=32).
    N, D, A = 3, 32, 16
    action_vector = jax.random.normal(k_act, (A, D), dtype=jnp.float32)

    # Case 1: B=32 (multiple grid steps, lane-dense path).
    seeds_32 = [jax.random.normal(k, (32, D), dtype=jnp.float32)
                for k in jax.random.split(k_seed, N)]
    _check(action_vector, seeds_32)

    # Case 2: B=20 (non-multiple-of-8 batch -> cdiv grid with a partial block).
    seeds_20 = [s[:20] for s in seeds_32]
    _check(action_vector, seeds_20)

    print("KERNEL_OK")
</pallas_src>

<mosaic_0001>
module attributes {stable_mosaic.version = 11 : i64} {
  func.func @_distributionlize_kernel(%arg0: i32, %arg1: memref<8x96xf32, #tpu.memory_space<vmem>>, %arg2: memref<96x128xf32, #tpu.memory_space<vmem>>, %arg3: memref<8x128xf32, #tpu.memory_space<vmem>>, %arg4: memref<8x128xf32, #tpu.memory_space<vmem>>) attributes {dimension_semantics = [#tpu.dimension_semantics<parallel>], iteration_bounds = array<i64: 4>, scalar_prefetch = 0 : i64, scratch_operands = 0 : i64, tpu.core_type = #tpu.core_type<tc>, window_params = [{transform_indices = @transform_0, window_bounds = array<i64: 8, 96>}, {pipeline_mode = #tpu.pipeline_mode<synchronous>, transform_indices = @transform_1, window_bounds = array<i64: 96, 128>}, {transform_indices = @transform_2, window_bounds = array<i64: 8, 128>}, {transform_indices = @transform_3, window_bounds = array<i64: 8, 128>}]} {
    %c0 = arith.constant 0 : index
    %c0_0 = arith.constant 0 : index
    %0 = vector.load %arg1[%c0, %c0_0] : memref<8x96xf32, #tpu.memory_space<vmem>>, vector<8x96xf32>
    %c0_1 = arith.constant 0 : index
    %c0_2 = arith.constant 0 : index
    %1 = vector.load %arg2[%c0_1, %c0_2] : memref<96x128xf32, #tpu.memory_space<vmem>>, vector<96x128xf32>
    %cst = arith.constant dense<0.000000e+00> : vector<8x128xf32>
    %2 = tpu.matmul %0, %1, %cst {dimension_numbers = #tpu.dot_dimension_numbers<[1], [0], [0], [1], [0, 0, 1, 1], [], []>} : vector<8x96xf32>, vector<96x128xf32>, vector<8x128xf32> -> vector<8x128xf32>
    %3 = tpu.iota {dimensions = array<i32: 1>} : vector<8x128xi32>
    %c48_i32 = arith.constant 48 : i32
    %4 = vector.broadcast %c48_i32 : i32 to vector<8x128xi32>
    %5 = arith.cmpi slt, %3, %4 : vector<8x128xi32>
    %cst_3 = arith.constant 0xFF800000 : f32
    %6 = vector.broadcast %cst_3 : f32 to vector<8x128xf32>
    %7 = arith.select %5, %2, %6 : vector<8x128xi1>, vector<8x128xf32>
    %cst_4 = arith.constant dense<0xFF800000> : vector<8xf32>
    %8 = vector.multi_reduction <maximumf>, %7, %cst_4 [1] : vector<8x128xf32> to vector<8xf32>
    %9 = vector.shape_cast %8 : vector<8xf32> to vector<8x1xf32>
    %10 = vector.broadcast %9 : vector<8x1xf32> to vector<8x128xf32>
    %11 = arith.subf %7, %10 : vector<8x128xf32>
    %12 = math.exp %11 : vector<8x128xf32>
    %cst_5 = arith.constant dense<0.000000e+00> : vector<8xf32>
    %13 = vector.multi_reduction <add>, %12, %cst_5 [1] : vector<8x128xf32> to vector<8xf32>
    %14 = vector.shape_cast %13 : vector<8xf32> to vector<8x1xf32>
    %15 = vector.broadcast %14 : vector<8x1xf32> to vector<8x128xf32>
    %16 = arith.divf %12, %15 : vector<8x128xf32>
    %c0_6 = arith.constant 0 : index
    %c0_7 = arith.constant 0 : index
    %17 = vector.load %arg3[%c0_6, %c0_7] : memref<8x128xf32, #tpu.memory_space<vmem>>, vector<8x128xf32>
    tpu.vector_store %arg3[%c0_6, %c0_7], %2 {strides = array<i32>} : memref<8x128xf32, #tpu.memory_space<vmem>>, vector<8x128xf32>,
    %c0_8 = arith.constant 0 : index
    %c0_9 = arith.constant 0 : index
    %18 = vector.load %arg4[%c0_8, %c0_9] : memref<8x128xf32, #tpu.memory_space<vmem>>, vector<8x128xf32>
    tpu.vector_store %arg4[%c0_8, %c0_9], %16 {strides = array<i32>} : memref<8x128xf32, #tpu.memory_space<vmem>>, vector<8x128xf32>,
    return
  }
  func.func @transform_0(%arg0: i32) -> (i32, i32) {
    %c0_i32 = arith.constant 0 : i32
    %c0_i32_0 = arith.constant 0 : i32
    return %arg0, %c0_i32 : i32, i32
  }
  func.func @transform_1(%arg0: i32) -> (i32, i32) {
    %c0_i32 = arith.constant 0 : i32
    %c0_i32_0 = arith.constant 0 : i32
    %c0_i32_1 = arith.constant 0 : i32
    return %c0_i32, %c0_i32_0 : i32, i32
  }
  func.func @transform_2(%arg0: i32) -> (i32, i32) {
    %c0_i32 = arith.constant 0 : i32
    %c0_i32_0 = arith.constant 0 : i32
    return %arg0, %c0_i32 : i32, i32
  }
  func.func @transform_3(%arg0: i32) -> (i32, i32) {
    %c0_i32 = arith.constant 0 : i32
    %c0_i32_0 = arith.constant 0 : i32
    return %arg0, %c0_i32 : i32, i32
  }
}

</mosaic_0001>

<llo_original>
// kernel: tpu_custom_call.1
$region0: #{tpu_custom_call.1}
  #allocation0 [shape = 'u32[]', space=smem, size = 0x4, offset = 0x4, fixed_abs, tag = 'smem constant byte address 0x4 - core index']
  #allocation1 [shape = 'u32[72,128]{1,0:T(1,128)}', space=vmem, size = 0x9000, scoped, tag = 'internal scratch']
  %s0 = inlined_call_operand.hbm [shape: f32[32,96], index: 0, kind: input, shape index: {}]
  %s1 = inlined_call_operand.hbm [shape: f32[96,128], index: 1, kind: input, shape index: {}]
  %s2 = inlined_call_operand.hbm [shape: f32[32,128], index: 2, kind: output, shape index: {0}]
  %s3 = inlined_call_operand.hbm [shape: f32[32,128], index: 3, kind: output, shape index: {1}]
  %4 = xla_tuple %s2, %s3
  %s5 = sld [smem:[#allocation0]]
  $region57: #{tpu_custom_call.1} parent=0
    _
  %s7 = ssub.s32 1, %s5
  %s8 = scalar_select 0, %s7, %s5
  $region1: #{tpu_custom_call.1} parent=0
    #allocation2 [shape = 'u8[8192]{0}', space=vmem, size = 0x2000, scoped, tag = 'input window, operand 0']
    #allocation3 [shape = 's32[2]{0}', space=sflag, size = 0x8, scoped, tag = 'scoped memory for tpu_custom_call.1']
    #allocation4 [shape = 's32[2]{0}', space=sflag, size = 0x8, scoped, tag = 'scoped memory for tpu_custom_call.1']
    #allocation5 [shape = 'u8[49152]{0}', space=vmem, size = 0xc000, scoped, tag = 'input window, operand 1, single buffered']
    #allocation6 [shape = 's32[1]{0}', space=sflag, size = 0x4, scoped, tag = 'scoped memory for tpu_custom_call.1']
    #allocation7 [shape = 'u8[8192]{0}', space=vmem, size = 0x2000, scoped, tag = 'output window, operand 0']
    #allocation8 [shape = 'u8[8192]{0}', space=vmem, size = 0x2000, scoped, tag = 'output window, operand 1']
    #allocation9 [shape = 's32[2]{0}', space=sflag, size = 0x8, scoped, tag = 'scoped memory for tpu_custom_call.1']
    %9 = vsyncpa [#allocation3], 0
    %s10 = scalar_lea.sflag [#allocation3], 1
    %11 = vsyncpa %s10, 0
    %12 = vsyncpa [#allocation6], 0
    %13 = vsyncpa [#allocation4], 0
    %s14 = scalar_lea.sflag [#allocation4], 1
    %15 = vsyncpa %s14, 0
    %16 = vsyncpa [#allocation9], 0
    %s17 = scalar_lea.sflag [#allocation9], 1
    %18 = vsyncpa %s17, 0
    loop: start=0, step=1, limit=6
    $region2: #{tpu_custom_call.1} parent=1 // loop_pre_header
      _
    $region3: #{tpu_custom_call.1} parent=1 // loop_header
      %s20 = sphi 0, %s24
      %p21 = scmp.ge.s32.totalorder %s20, 6
      %s30 = sphi 0, %s32
      %s33 = sphi 0, %s30
      %s34 = sphi 0, %s33
      %s50 = sphi 0, %s34
      %s54 = sphi 0, %s54
      %s56 = sphi 0, %s54
      %s57 = sphi 0, %s56
      %s71 = sphi 0, %s57
      %s77 = sphi 0, %s79
      %s80 = sphi 0, %s77
      %s81 = sphi 0, %s80
      %s97 = sphi 0, %s81
      %s103 = sphi 0, %s105
      %s106 = sphi 0, %s103
      %s107 = sphi 0, %s106
      %s123 = sphi 0, %s107
    $region4: #{tpu_custom_call.1} parent=1 // loop_header_branch
      %23 = sbr.rel (%p21) target = $region8
    $region5: #{tpu_custom_call.1} parent=1 // loop_body
      %s25 = ssub.s32 %s20, 1
      %s26 = ssub.s32 %s20, 2
      %s27 = sadd.s32 %s20, 1
      %s28 = ssub.s32 %s20, %s27
      %p29 = scmp.eq.s32.totalorder %s28, 0
      %s31 = sadd.s32 %s30, 1
      %s32 = scalar_select %p29, %s30, %s31
      %p35 = pneg %p29
      %p36 = scmp.eq.s32.totalorder %s20, 3
      %p37 = por %p35, %p36
      %p38 = scmp.ne.s32.totalorder %s30, %s33
      %p39 = scmp.eq.s32.totalorder %s20, 0
      %p40 = por %p38, %p39
      %p41 = scmp.ne.s32.totalorder %s30, %s33
      %p42 = scmp.eq.s32.totalorder %s25, 3
      %p43 = por %p41, %p42
      %p44 = scmp.ne.s32.totalorder %s33, %s34
      %p45 = scmp.eq.s32.totalorder %s25, 0
      %p46 = por %p44, %p45
      %p47 = scmp.ne.s32.totalorder %s33, %s34
      %p48 = scmp.eq.s32.totalorder %s26, 3
      %p49 = por %p47, %p48
      %p51 = scmp.ne.s32.totalorder %s34, %s50
      %p52 = scmp.eq.s32.totalorder %s26, 0
      %p53 = por %p51, %p52
      %s55 = sadd.s32 %s54, 1
      %p58 = scmp.eq.s32.totalorder %s20, 3
      %p59 = scmp.ne.s32.totalorder %s54, %s56
      %p60 = scmp.eq.s32.totalorder %s20, 0
      %p61 = por %p59, %p60
      %p62 = scmp.ne.s32.totalorder %s54, %s56
      %p63 = scmp.eq.s32.totalorder %s25, 3
      %p64 = por %p62, %p63
      %p65 = scmp.ne.s32.totalorder %s56, %s57
      %p66 = scmp.eq.s32.totalorder %s25, 0
      %p67 = por %p65, %p66
      %p68 = scmp.ne.s32.totalorder %s56, %s57
      %p69 = scmp.eq.s32.totalorder %s26, 3
      %p70 = por %p68, %p69
      %p72 = scmp.ne.s32.totalorder %s57, %s71
      %p73 = scmp.eq.s32.totalorder %s26, 0
      %p74 = por %p72, %p73
      %s75 = ssub.s32 %s20, %s27
      %p76 = scmp.eq.s32.totalorder %s75, 0
      %s78 = sadd.s32 %s77, 1
      %s79 = scalar_select %p76, %s77, %s78
      %p82 = pneg %p76
      %p83 = scmp.eq.s32.totalorder %s20, 3
      %p84 = por %p82, %p83
      %p85 = scmp.ne.s32.totalorder %s77, %s80
      %p86 = scmp.eq.s32.totalorder %s20, 0
      %p87 = por %p85, %p86
      %p88 = scmp.ne.s32.totalorder %s77, %s80
      %p89 = scmp.eq.s32.totalorder %s25, 3
      %p90 = por %p88, %p89
      %p91 = scmp.ne.s32.totalorder %s80, %s81
      %p92 = scmp.eq.s32.totalorder %s25, 0
      %p93 = por %p91, %p92
      %p94 = scmp.ne.s32.totalorder %s80, %s81
      %p95 = scmp.eq.s32.totalorder %s26, 3
      %p96 = por %p94, %p95
      %p98 = scmp.ne.s32.totalorder %s81, %s97
      %p99 = scmp.eq.s32.totalorder %s26, 0
      %p100 = por %p98, %p99
      %s101 = ssub.s32 %s20, %s27
      %p102 = scmp.eq.s32.totalorder %s101, 0
      %s104 = sadd.s32 %s103, 1
      %s105 = scalar_select %p102, %s103, %s104
      %p108 = pneg %p102
      %p109 = scmp.eq.s32.totalorder %s20, 3
      %p110 = por %p108, %p109
      %p111 = scmp.ne.s32.totalorder %s103, %s106
      %p112 = scmp.eq.s32.totalorder %s20, 0
      %p113 = por %p111, %p112
      %p114 = scmp.ne.s32.totalorder %s103, %s106
      %p115 = scmp.eq.s32.totalorder %s25, 3
      %p116 = por %p114, %p115
      %p117 = scmp.ne.s32.totalorder %s106, %s107
      %p118 = scmp.eq.s32.totalorder %s25, 0
      %p119 = por %p117, %p118
      %p120 = scmp.ne.s32.totalorder %s106, %s107
      %p121 = scmp.eq.s32.totalorder %s26, 3
      %p122 = por %p120, %p121
      %p124 = scmp.ne.s32.totalorder %s107, %s123
      %p125 = scmp.eq.s32.totalorder %s26, 0
      %p126 = por %p124, %p125
      %p127 = scmp.le.s32.totalorder 1, %s20
      %p128 = scmp.lt.s32.totalorder %s20, 5
      %p129 = pnand %p127, %p128
      %p130 = pneg %p129
      // Predicated region
      $region9: #{tpu_custom_call.1} parent=5 // pred_check
        _
      $region10: #{tpu_custom_call.1} parent=5 // pred_check_branch
        %132 = sbr.rel (%p129) target = $region12
      $region11: #{tpu_custom_call.1} parent=5 // pred_region
        %s133 = ssub.s32 %s20, 1
        // Predicated region
        $region13: #{tpu_custom_call.1} parent=11 // pred_check
          %p134 = pneg %p67
        $region14: #{tpu_custom_call.1} parent=11 // pred_check_branch
          %136 = sbr.rel (%p134) target = $region16
        $region15: #{tpu_custom_call.1} parent=11 // pred_region
          %138 = vsyncadd [#allocation6], 0
          %s139 = sshll.u32 %s1, 4
          %s140 = int_to_ptr.hbm [resolvable:$true] %s139
          %s141 = sshll.u32 [#allocation5], 4
          %s142 = int_to_ptr.vmem [resolvable:$true] %s141
          %147 = dma.hbm_to_vmem [thread:$0]  %s140, 1536, %s142, [#allocation6], 128, 128, 8
        $region16: #{tpu_custom_call.1} parent=11 // pred_fallthru
          _
      $region12: #{tpu_custom_call.1} parent=5 // pred_fallthru
        _
      %p148 = scmp.lt.s32.totalorder %s20, 4
      // Predicated region
      $region17: #{tpu_custom_call.1} parent=5 // pred_check
        %p149 = pneg %p148
      $region18: #{tpu_custom_call.1} parent=5 // pred_check_branch
        %151 = sbr.rel (%p149) target = $region20
      $region19: #{tpu_custom_call.1} parent=5 // pred_region
        // Predicated region
        $region21: #{tpu_custom_call.1} parent=19 // pred_check
          %p152 = pneg %p40
        $region22: #{tpu_custom_call.1} parent=19 // pred_check_branch
          %154 = sbr.rel (%p152) target = $region24
        $region23: #{tpu_custom_call.1} parent=19 // pred_region
          %s155 = sand.u32 %s30, 1
          %s156 = scalar_lea.sflag [#allocation3], %s155
          %s157 = sand.u32 %s30, 1
          %s158 = smul.addr %s157, 8
          %s159 = scalar_lea.vmem [#allocation2], %s158
          %161 = vsyncadd %s156, 0
          %s162 = smul.addr %s20, 8
          %s163 = scalar_lea.hbm %s0, %s162
          %s165 = sshll.u32 %s163, 4
          %s166 = int_to_ptr.hbm [resolvable:$true] %s165
          %s167 = sshll.u32 %s159, 4
          %s168 = int_to_ptr.vmem [resolvable:$true] %s167
          %170 = dma.hbm_to_vmem [thread:$0]  %s166, 128, %s168, %s156
        $region24: #{tpu_custom_call.1} parent=19 // pred_fallthru
          _
      $region20: #{tpu_custom_call.1} parent=5 // pred_fallthru
        _
      %p171 = scmp.le.s32.totalorder 1, %s20
      %p172 = scmp.lt.s32.totalorder %s20, 5
      %p173 = pnand %p171, %p172
      %p174 = pneg %p173
      // Predicated region
      $region25: #{tpu_custom_call.1} parent=5 // pred_check
        _
      $region26: #{tpu_custom_call.1} parent=5 // pred_check_branch
        %176 = sbr.rel (%p173) target = $region28
      $region27: #{tpu_custom_call.1} parent=5 // pred_region
        %s177 = ssub.s32 %s20, 1
        %s178 = sand.u32 %s33, 1
        %s179 = scalar_lea.sflag [#allocation3], %s178
        %s180 = sand.u32 %s33, 1
        %s181 = smul.addr %s180, 8
        %s182 = scalar_lea.vmem [#allocation2], %s181
        // Predicated region
        $region29: #{tpu_custom_call.1} parent=27 // pred_check
          %p183 = pneg %p46
        $region30: #{tpu_custom_call.1} parent=27 // pred_check_branch
          %185 = sbr.rel (%p183) target = $region32
        $region31: #{tpu_custom_call.1} parent=27 // pred_region
          %187 = dma.done %s179, 128
        $region32: #{tpu_custom_call.1} parent=27 // pred_fallthru
          _
        // Predicated region
        $region33: #{tpu_custom_call.1} parent=27 // pred_check
          %p188 = pneg %p67
        $region34: #{tpu_custom_call.1} parent=27 // pred_check_branch
          %190 = sbr.rel (%p188) target = $region36
        $region35: #{tpu_custom_call.1} parent=27 // pred_region
          %192 = dma.done [#allocation6], 1536
        $region36: #{tpu_custom_call.1} parent=27 // pred_fallthru
          _
        %s193 = sand.u32 %s33, 1
        %s194 = scalar_lea.sflag [#allocation3], %s193
        %s195 = sand.u32 %s33, 1
        %s196 = smul.addr %s195, 8
        %s197 = scalar_lea.vmem [#allocation2], %s196
        %p198 = pneg %p46
        %p199 = pneg %p43
        %p200 = pneg %p67
        %p201 = pneg %p64
        %p202 = pneg %p93
        %p203 = pneg %p90
        %s204 = sand.u32 %s80, 1
        %s205 = scalar_lea.sflag [#allocation4], %s204
        %s206 = sand.u32 %s80, 1
        %s207 = smul.addr %s206, 8
        %s208 = scalar_lea.vmem [#allocation7], %s207
        %p209 = pneg %p119
        %p210 = pneg %p116
        %s211 = sand.u32 %s106, 1
        %s212 = scalar_lea.sflag [#allocation9], %s211
        %s213 = sand.u32 %s106, 1
        %s214 = smul.addr %s213, 8
        %s215 = scalar_lea.vmem [#allocation8], %s214
        %v216 = vld [vmem:[%s182] sm:$0xff]
        %v217 = vld [vmem:[#allocation5] sm:$0xff]
        %v218 = vld [vmem:[#allocation5 + $0x8] sm:$0xff]
        %v219 = vld [vmem:[#allocation5 + $0x10] sm:$0xff]
        %v220 = vld [vmem:[#allocation5 + $0x18] sm:$0xff]
        %v221 = vld [vmem:[#allocation5 + $0x20] sm:$0xff]
        %v222 = vld [vmem:[#allocation5 + $0x28] sm:$0xff]
        %v223 = vld [vmem:[#allocation5 + $0x30] sm:$0xff]
        %v224 = vld [vmem:[#allocation5 + $0x38] sm:$0xff]
        %v225 = vld [vmem:[#allocation5 + $0x40] sm:$0xff]
        %v226 = vld [vmem:[#allocation5 + $0x48] sm:$0xff]
        %v227 = vld [vmem:[#allocation5 + $0x50] sm:$0xff]
        %v228 = vld [vmem:[#allocation5 + $0x58] sm:$0xff]
        %vm229 = vcmask 785408
        %v231 = vsel %vm229, %v216, 0
        %233 = vmatpush.msra.mxu0 0.0
        %234 = vmatpush.msra.mxu0 0.0
        %235 = vmatpush.msra.mxu0 0.0
        %236 = vmatpush.msra.mxu0 0.0
        %237 = vmatpush.msra.mxu0 %v228
        %238 = vmatpush.msra.mxu0 %v227
        %239 = vmatpush.msra.mxu0 %v226
        %240 = vmatpush.msra.mxu0 %v225
        %241 = vmatpush.msra.mxu0 %v224
        %242 = vmatpush.msra.mxu0 %v223
        %243 = vmatpush.msra.mxu0 %v222
        %244 = vmatpush.msra.mxu0 %v221
        %245 = vmatpush.msra.mxu0 %v220
        %246 = vmatpush.msra.mxu0 %v219
        %247 = vmatpush.msra.mxu0 %v218
        %248 = vmatpush.msra.mxu0 %v217
        %249 = vmatmul.f32.gmra.mxu0 %v231
        %v250 = vpop.f32.mrf.mxu0
        %v251 = vadd.f32 0.0, %v250
        %252 = vdwg.mxu0
        %v253 = vlaneseq
        %v254 = vand.u32 %v253, 127
        %vm255 = vcmp.lt.s32.totalorder %v254, 48
        %v256 = vsel %vm255, %v251, -inf
        %257 = vmax.xlane.f32.xlu0 %v256
        %v258 = vpop.xlane.xlu0 %257
        %v259 = vsub.f32 %v256, %v258
        %v260 = vmul.f32 %v259, 1.442695
        %v261 = vpow.pop %v260
        %262 = vadd.xlane.f32.xlu0 %v261
        %v263 = vpop.xlane.xlu0 %262
        %v264 = vrcp.pop %v263
        %v265 = vmul.f32 %v263, %v264
        %v266 = vsub.f32 1.0, %v265
        %v267 = vmul.f32 %v264, %v266
        %v268 = vadd.f32 %v264, %v267
        %vm269 = vweird.f32 %v263
        %vm270 = vweird.f32 %v264
        %vm271 = vmor %vm269, %vm270
        %v272 = vsel %vm271, %v264, %v268
        %v273 = vand.u32 2147483647, %v263
        %vm274 = vcmp.eq.f32.partialorder %v273, 8.507059e+37
        %v275 = vand.u32 %v263, 2147483648
        %v276 = vor.u32 1.1754944e-38, %v275
        %v277 = vsel %vm274, %v276, %v272
        %v278 = vmul.f32 %v261, %v277
        %279 = vst [vmem:[%s208] sm:$0xff] %v251
        %280 = vst [vmem:[%s215] sm:$0xff] %v278
        %s281 = sand.u32 %s80, 1
        %s282 = scalar_lea.sflag [#allocation4], %s281
        %s283 = sand.u32 %s80, 1
        %s284 = smul.addr %s283, 8
        %s285 = scalar_lea.vmem [#allocation7], %s284
        %s286 = sand.u32 %s106, 1
        %s287 = scalar_lea.sflag [#allocation9], %s286
        %s288 = sand.u32 %s106, 1
        %s289 = smul.addr %s288, 8
        %s290 = scalar_lea.vmem [#allocation8], %s289
        // Predicated region
        $region37: #{tpu_custom_call.1} parent=27 // pred_check
          %p291 = pneg %p90
        $region38: #{tpu_custom_call.1} parent=27 // pred_check_branch
          %293 = sbr.rel (%p291) target = $region40
        $region39: #{tpu_custom_call.1} parent=27 // pred_region
          %295 = vsyncadd %s282, 0
          %s296 = smul.addr %s25, 8
          %s297 = scalar_lea.hbm %s2, %s296
          %s299 = sshll.u32 %s285, 4
          %s300 = int_to_ptr.vmem [resolvable:$true] %s299
          %s301 = sshll.u32 %s297, 4
          %s302 = int_to_ptr.hbm [resolvable:$true] %s301
          %304 = dma.vmem_to_hbm [thread:$0]  %s300, 128, %s302, %s282
        $region40: #{tpu_custom_call.1} parent=27 // pred_fallthru
          _
        // Predicated region
        $region41: #{tpu_custom_call.1} parent=27 // pred_check
          %p305 = pneg %p116
        $region42: #{tpu_custom_call.1} parent=27 // pred_check_branch
          %307 = sbr.rel (%p305) target = $region44
        $region43: #{tpu_custom_call.1} parent=27 // pred_region
          %309 = vsyncadd %s287, 0
          %s310 = smul.addr %s25, 8
          %s311 = scalar_lea.hbm %s3, %s310
          %s313 = sshll.u32 %s290, 4
          %s314 = int_to_ptr.vmem [resolvable:$true] %s313
          %s315 = sshll.u32 %s311, 4
          %s316 = int_to_ptr.hbm [resolvable:$true] %s315
          %318 = dma.vmem_to_hbm [thread:$0]  %s314, 128, %s316, %s287
        $region44: #{tpu_custom_call.1} parent=27 // pred_fallthru
          _
      $region28: #{tpu_custom_call.1} parent=5 // pred_fallthru
        _
      %p319 = scmp.le.s32.totalorder 2, %s20
      // Predicated region
      $region45: #{tpu_custom_call.1} parent=5 // pred_check
        %p320 = pneg %p319
      $region46: #{tpu_custom_call.1} parent=5 // pred_check_branch
        %322 = sbr.rel (%p320) target = $region48
      $region47: #{tpu_custom_call.1} parent=5 // pred_region
        %s323 = ssub.s32 %s20, 2
        // Predicated region
        $region49: #{tpu_custom_call.1} parent=47 // pred_check
          %p324 = pneg %p96
        $region50: #{tpu_custom_call.1} parent=47 // pred_check_branch
          %326 = sbr.rel (%p324) target = $region52
        $region51: #{tpu_custom_call.1} parent=47 // pred_region
          %s327 = sand.u32 %s81, 1
          %s328 = scalar_lea.sflag [#allocation4], %s327
          %s329 = sand.u32 %s81, 1
          %s330 = smul.addr %s329, 8
          %s331 = scalar_lea.vmem [#allocation7], %s330
          %333 = dma.done %s328, 128
        $region52: #{tpu_custom_call.1} parent=47 // pred_fallthru
          _
        // Predicated region
        $region53: #{tpu_custom_call.1} parent=47 // pred_check
          %p334 = pneg %p122
        $region54: #{tpu_custom_call.1} parent=47 // pred_check_branch
          %336 = sbr.rel (%p334) target = $region56
        $region55: #{tpu_custom_call.1} parent=47 // pred_region
          %s337 = sand.u32 %s107, 1
          %s338 = scalar_lea.sflag [#allocation9], %s337
          %s339 = sand.u32 %s107, 1
          %s340 = smul.addr %s339, 8
          %s341 = scalar_lea.vmem [#allocation8], %s340
          %343 = dma.done %s338, 128
        $region56: #{tpu_custom_call.1} parent=47 // pred_fallthru
          _
      $region48: #{tpu_custom_call.1} parent=5 // pred_fallthru
        _
    $region6: #{tpu_custom_call.1} parent=1 // loop_footer
      %s24 = sadd.s32 1, %s20
    $region7: #{tpu_custom_call.1} parent=1 // loop_footer_branch
      %19 = sbr.rel target = $region3
    $region8: #{tpu_custom_call.1} parent=1 // loop_exit
      _
    %344 = vsyncpa [#allocation3], 1
    %s345 = scalar_lea.sflag [#allocation3], 1
    %346 = vsyncpa %s345, 1
    %347 = vsyncpa [#allocation6], 1
    %348 = vsyncpa [#allocation4], 1
    %s349 = scalar_lea.sflag [#allocation4], 1
    %350 = vsyncpa %s349, 1
    %351 = vsyncpa [#allocation9], 1
    %s352 = scalar_lea.sflag [#allocation9], 1
    %353 = vsyncpa %s352, 1

</llo_original>
